<compile_context>
chip_gen: v6e
topology: v6e:2x2x1
jax: 0.10.0
libtpu: 0.0.40
codegen_flags: <defaults>
</compile_context>

<pallas_src>
import functools

import jax
import jax.numpy as jnp
from jax import lax
from jax.experimental import pallas as pl
from jax.experimental.pallas import tpu as pltpu

F32_MIN = jnp.finfo(jnp.float32).min


def _round_up(x, m):
    return ((x + m - 1) // m) * m


def actor_kernel(state_ref, mask_ref,
                 w1_ref, b1_ref, w2_ref, b2_ref, w3_ref, b3_ref,
                 ret_ref):
    mm_dt = w1_ref.dtype                                    # f32 or bf16 (flag)
    x = state_ref[...]                                      # [TB, S] f32

    # obs_layer: Linear(state_dim -> H)   (no activation, per reference)
    h = jnp.dot(x.astype(mm_dt), w1_ref[...],
                preferred_element_type=jnp.float32) + b1_ref[...]

    # actor_layer: Linear(H->H) -> Tanh -> Linear(H->Ap)
    h2 = jnp.tanh(jnp.dot(h.astype(mm_dt), w2_ref[...],
                          preferred_element_type=jnp.float32) + b2_ref[...])
    logits = jnp.dot(h2.astype(mm_dt), w3_ref[...],
                     preferred_element_type=jnp.float32) + b3_ref[...]  # [TB, Ap]

    # inf_mask = clamp(log(mask), min=float32_min); padded cols have mask=0.0
    # -> log=-inf -> clamped to F32_MIN, so they underflow out of the softmax.
    inf_mask = jnp.maximum(jnp.log(mask_ref[...]), F32_MIN)
    logits = logits + inf_mask

    # hard_sample: stable softmax, first-occurrence argmax, one-hot,
    # straight-through forward value.
    m = jnp.max(logits, axis=-1, keepdims=True)
    e = jnp.exp(logits - m)
    y_soft = e * pl.reciprocal(jnp.sum(e, axis=-1, keepdims=True), approx=True)

    ap = logits.shape[-1]
    col = lax.broadcasted_iota(jnp.int32, logits.shape, 1)  # [TB, Ap]
    is_max = logits == m
    index = jnp.min(jnp.where(is_max, col, ap), axis=-1, keepdims=True)  # [TB,1]
    y_hard = (col == index).astype(jnp.float32)

    # forward value of  y_hard - y_soft.detach() + y_soft  (same fp ordering);
    # non-max columns are exactly (0 - y_soft) + y_soft == 0.0.
    ret_ref[...] = (y_hard - y_soft) + y_soft


def actor_forward(state, action_mask, params, *,
                  block_b=1024, use_bf16_matmul=False):
    """state: [B, S] f32, action_mask: [B, A] (any numeric dtype).

    Returns (ret [B, A] f32, index [B, 1] int32), matching the PyTorch forward.
    """
    w1, b1, w2, b2, w3, b3 = params
    B, S = state.shape
    A = action_mask.shape[-1]
    H = w1.shape[1]

    state = state.astype(jnp.float32)
    mask = action_mask.astype(jnp.float32)
    w1 = w1.astype(jnp.float32); b1 = b1.astype(jnp.float32)
    w2 = w2.astype(jnp.float32); b2 = b2.astype(jnp.float32)
    w3 = w3.astype(jnp.float32); b3 = b3.astype(jnp.float32)

    # ---- lane-dense action dim: pad A up to a multiple of 128 ----------------
    Ap = _round_up(max(A, 128), 128)
    if Ap != A:
        w3 = jnp.pad(w3, ((0, 0), (0, Ap - A)))              # zero weight cols
        b3 = jnp.pad(b3, ((0, 0), (0, Ap - A)))               # zero bias cols
        mask = jnp.pad(mask, ((0, 0), (0, Ap - A)))            # mask=0 -> F32_MIN

    # Optional bf16 matmul path (v6e/v7x MXU); elementwise math stays f32.
    if use_bf16_matmul:
        w1 = w1.astype(jnp.bfloat16)
        w2 = w2.astype(jnp.bfloat16)
        w3 = w3.astype(jnp.bfloat16)

    # ---- batch tiling ---------------------------------------------------------
    # Multiple of 8 (f32 sublane), capped at 2048 so the double-buffered working
    # set (state/mask/ret tiles) stays a few MiB even within v7x's 32 MiB scoped
    # VMEM default -- no vmem_limit override needed.
    tb = min(int(block_b), 2048, _round_up(B, 8))
    tb = max(8, (tb // 8) * 8)
    # v7x megacore: make sure the "parallel" batch axis has >=2 grid steps so
    # both TensorCores get work (no-op for single-TC v5e/v6e beyond ~0.35us).
    if tb > 8 and pl.cdiv(B, tb) < 2:
        tb = max(8, _round_up(tb // 2, 8))

    Bp = _round_up(B, tb)
    if Bp != B:
        state = jnp.pad(state, ((0, Bp - B), (0, 0)))
        # pad batch rows with mask=1.0 so padded rows stay numerically benign
        mask = jnp.pad(mask, ((0, Bp - B), (0, 0)), constant_values=1.0)

    grid = (Bp // tb,)

    def batch_spec(cols):
        return pl.BlockSpec((tb, cols), lambda i: (i, 0))

    def const_spec(shp):
        return pl.BlockSpec(shp, lambda i: (0, 0))

    wbytes = 2 if use_bf16_matmul else 4
    flops = 2 * Bp * (S * H + H * H + H * Ap)
    transcendentals = Bp * (H + 2 * Ap)                 # tanh + exp + log
    bytes_accessed = (4 * Bp * (S + 2 * Ap)
                      + wbytes * (S * H + H * H + H * Ap)
                      + 4 * (2 * H + Ap))

    ret = pl.pallas_call(
        actor_kernel,
        out_shape=jax.ShapeDtypeStruct((Bp, Ap), jnp.float32),
        grid_spec=pltpu.PrefetchScalarGridSpec(
            num_scalar_prefetch=0,
            grid=grid,
            in_specs=[batch_spec(S), batch_spec(Ap),
                      const_spec((S, H)), const_spec((1, H)),
                      const_spec((H, H)), const_spec((1, H)),
                      const_spec((H, Ap)), const_spec((1, Ap))],
            out_specs=batch_spec(Ap),
        ),
        compiler_params=pltpu.CompilerParams(
            dimension_semantics=("parallel",)),
        cost_estimate=pl.CostEstimate(
            flops=flops,
            transcendentals=transcendentals,
            bytes_accessed=bytes_accessed),
    )(state, mask, w1, b1, w2, b2, w3, b3)

    ret = ret[:B, :A]
    # ret is exactly 0.0 in every non-selected column and ~1.0 in the selected
    # one, so argmax(ret) reproduces the kernel's first-occurrence argmax.
    idx = jnp.argmax(ret, axis=-1)[:, None].astype(jnp.int32)
    return ret, idx


def actor_reference(state, action_mask, params):
    """Plain-JAX reference matching the PyTorch forward."""
    w1, b1, w2, b2, w3, b3 = params
    h = state @ w1 + b1
    h2 = jnp.tanh(h @ w2 + b2)
    logits = h2 @ w3 + b3
    inf_mask = jnp.maximum(jnp.log(action_mask.astype(jnp.float32)), F32_MIN)
    logits = logits + inf_mask
    y_soft = jax.nn.softmax(logits, axis=-1)
    index = jnp.argmax(logits, axis=-1, keepdims=True)
    y_hard = jax.nn.one_hot(index[:, 0], logits.shape[-1], dtype=jnp.float32)
    ret = (y_hard - y_soft) + y_soft
    return ret, index.astype(jnp.int32)


def init_params(key, state_dim, action_dim, n_latent_var):
    ks = jax.random.split(key, 6)

    def lin(kw, kb, fan_in, fan_out):
        bound = 1.0 / jnp.sqrt(fan_in)
        w = jax.random.uniform(kw, (fan_in, fan_out), jnp.float32, -bound, bound)
        b = jax.random.uniform(kb, (1, fan_out), jnp.float32, -bound, bound)
        return w, b

    w1, b1 = lin(ks[0], ks[1], state_dim, n_latent_var)
    w2, b2 = lin(ks[2], ks[3], n_latent_var, n_latent_var)
    w3, b3 = lin(ks[4], ks[5], n_latent_var, action_dim)
    return (w1, b1, w2, b2, w3, b3)


if __name__ == "__main__":
    B, STATE_DIM, ACTION_DIM, HIDDEN = 32, 16, 16, 32

    key = jax.random.PRNGKey(0)
    k_state, k_mask, k_param = jax.random.split(key, 3)

    state = jax.random.normal(k_state, (B, STATE_DIM), jnp.float32)
    # binary action mask with at least one legal action per row
    mask = (jax.random.uniform(k_mask, (B, ACTION_DIM)) > 0.5).astype(jnp.float32)
    mask = mask.at[:, 0].set(1.0)

    params = init_params(k_param, STATE_DIM, ACTION_DIM, HIDDEN)

    ret_ref, idx_ref = actor_reference(state, mask, params)

    def check(ret, idx):
        assert ret.shape == (B, ACTION_DIM) and idx.shape == (B, 1)
        assert bool(jnp.all(idx == idx_ref)), "argmax index mismatch"
        assert bool(jnp.max(jnp.abs(ret - ret_ref)) < 1e-5), "ret mismatch"
        assert bool(jnp.all(jnp.abs(jnp.sum(ret, axis=-1) - 1.0) < 1e-5))
        assert bool(jnp.all(jnp.take_along_axis(mask, idx, axis=1) == 1.0))

    # Default path (single big tile halved to a 2-step grid for v7x megacore).
    ret, idx = actor_forward(state, mask, params)
    jax.block_until_ready((ret, idx))
    check(ret, idx)

    # block_b=8 exercises a multi-step (4-iteration) batch grid at small shapes.
    ret2, idx2 = actor_forward(state, mask, params, block_b=8)
    jax.block_until_ready((ret2, idx2))
    check(ret2, idx2)

    # TODO(synk): the straight-through estimator's backward (detach) semantics
    # are a training-time autograd concern and are not represented here.
    print("KERNEL_OK")
</pallas_src>

<mosaic_0001>
module attributes {stable_mosaic.version = 11 : i64} {
  func.func @actor_kernel(%arg0: i32, %arg1: memref<16x16xf32, #tpu.memory_space<vmem>>, %arg2: memref<16x128xf32, #tpu.memory_space<vmem>>, %arg3: memref<16x32xf32, #tpu.memory_space<vmem>>, %arg4: memref<1x32xf32, #tpu.memory_space<vmem>>, %arg5: memref<32x32xf32, #tpu.memory_space<vmem>>, %arg6: memref<1x32xf32, #tpu.memory_space<vmem>>, %arg7: memref<32x128xf32, #tpu.memory_space<vmem>>, %arg8: memref<1x128xf32, #tpu.memory_space<vmem>>, %arg9: memref<16x128xf32, #tpu.memory_space<vmem>>) attributes {dimension_semantics = [#tpu.dimension_semantics<parallel>], iteration_bounds = array<i64: 2>, scalar_prefetch = 0 : i64, scratch_operands = 0 : i64, tpu.core_type = #tpu.core_type<tc>, window_params = [{transform_indices = @transform_0, window_bounds = array<i64: 16, 16>}, {transform_indices = @transform_1, window_bounds = array<i64: 16, 128>}, {pipeline_mode = #tpu.pipeline_mode<synchronous>, transform_indices = @transform_2, window_bounds = array<i64: 16, 32>}, {pipeline_mode = #tpu.pipeline_mode<synchronous>, transform_indices = @transform_3, window_bounds = array<i64: 1, 32>}, {pipeline_mode = #tpu.pipeline_mode<synchronous>, transform_indices = @transform_4, window_bounds = array<i64: 32, 32>}, {pipeline_mode = #tpu.pipeline_mode<synchronous>, transform_indices = @transform_5, window_bounds = array<i64: 1, 32>}, {pipeline_mode = #tpu.pipeline_mode<synchronous>, transform_indices = @transform_6, window_bounds = array<i64: 32, 128>}, {pipeline_mode = #tpu.pipeline_mode<synchronous>, transform_indices = @transform_7, window_bounds = array<i64: 1, 128>}, {transform_indices = @transform_8, window_bounds = array<i64: 16, 128>}]} {
    %c0 = arith.constant 0 : index
    %c0_0 = arith.constant 0 : index
    %0 = vector.load %arg1[%c0, %c0_0] : memref<16x16xf32, #tpu.memory_space<vmem>>, vector<16x16xf32>
    %c0_1 = arith.constant 0 : index
    %c0_2 = arith.constant 0 : index
    %1 = vector.load %arg3[%c0_1, %c0_2] : memref<16x32xf32, #tpu.memory_space<vmem>>, vector<16x32xf32>
    %cst = arith.constant dense<0.000000e+00> : vector<16x32xf32>
    %2 = tpu.matmul %0, %1, %cst {dimension_numbers = #tpu.dot_dimension_numbers<[1], [0], [0], [1], [0, 0, 1, 1], [], []>} : vector<16x16xf32>, vector<16x32xf32>, vector<16x32xf32> -> vector<16x32xf32>
    %c0_3 = arith.constant 0 : index
    %c0_4 = arith.constant 0 : index
    %3 = vector.load %arg4[%c0_3, %c0_4] : memref<1x32xf32, #tpu.memory_space<vmem>>, vector<1x32xf32>
    %4 = vector.broadcast %3 : vector<1x32xf32> to vector<16x32xf32>
    %5 = arith.addf %2, %4 : vector<16x32xf32>
    %c0_5 = arith.constant 0 : index
    %c0_6 = arith.constant 0 : index
    %6 = vector.load %arg5[%c0_5, %c0_6] : memref<32x32xf32, #tpu.memory_space<vmem>>, vector<32x32xf32>
    %cst_7 = arith.constant dense<0.000000e+00> : vector<16x32xf32>
    %7 = tpu.matmul %5, %6, %cst_7 {dimension_numbers = #tpu.dot_dimension_numbers<[1], [0], [0], [1], [0, 0, 1, 1], [], []>} : vector<16x32xf32>, vector<32x32xf32>, vector<16x32xf32> -> vector<16x32xf32>
    %c0_8 = arith.constant 0 : index
    %c0_9 = arith.constant 0 : index
    %8 = vector.load %arg6[%c0_8, %c0_9] : memref<1x32xf32, #tpu.memory_space<vmem>>, vector<1x32xf32>
    %9 = vector.broadcast %8 : vector<1x32xf32> to vector<16x32xf32>
    %10 = arith.addf %7, %9 : vector<16x32xf32>
    %11 = math.tanh %10 : vector<16x32xf32>
    %c0_10 = arith.constant 0 : index
    %c0_11 = arith.constant 0 : index
    %12 = vector.load %arg7[%c0_10, %c0_11] : memref<32x128xf32, #tpu.memory_space<vmem>>, vector<32x128xf32>
    %cst_12 = arith.constant dense<0.000000e+00> : vector<16x128xf32>
    %13 = tpu.matmul %11, %12, %cst_12 {dimension_numbers = #tpu.dot_dimension_numbers<[1], [0], [0], [1], [0, 0, 1, 1], [], []>} : vector<16x32xf32>, vector<32x128xf32>, vector<16x128xf32> -> vector<16x128xf32>
    %c0_13 = arith.constant 0 : index
    %c0_14 = arith.constant 0 : index
    %14 = vector.load %arg8[%c0_13, %c0_14] : memref<1x128xf32, #tpu.memory_space<vmem>>, vector<1x128xf32>
    %15 = vector.broadcast %14 : vector<1x128xf32> to vector<16x128xf32>
    %16 = arith.addf %13, %15 : vector<16x128xf32>
    %c0_15 = arith.constant 0 : index
    %c0_16 = arith.constant 0 : index
    %17 = vector.load %arg2[%c0_15, %c0_16] : memref<16x128xf32, #tpu.memory_space<vmem>>, vector<16x128xf32>
    %18 = math.log %17 : vector<16x128xf32>
    %cst_17 = arith.constant -3.40282347E+38 : f32
    %19 = vector.broadcast %cst_17 : f32 to vector<16x128xf32>
    %20 = arith.maximumf %18, %19 : vector<16x128xf32>
    %21 = arith.addf %16, %20 : vector<16x128xf32>
    %cst_18 = arith.constant dense<0xFF800000> : vector<16xf32>
    %22 = vector.multi_reduction <maximumf>, %21, %cst_18 [1] : vector<16x128xf32> to vector<16xf32>
    %23 = vector.shape_cast %22 : vector<16xf32> to vector<16x1xf32>
    %24 = vector.broadcast %23 : vector<16x1xf32> to vector<16x128xf32>
    %25 = arith.subf %21, %24 : vector<16x128xf32>
    %26 = math.exp %25 : vector<16x128xf32>
    %cst_19 = arith.constant dense<0.000000e+00> : vector<16xf32>
    %27 = vector.multi_reduction <add>, %26, %cst_19 [1] : vector<16x128xf32> to vector<16xf32>
    %28 = vector.shape_cast %27 : vector<16xf32> to vector<16x1xf32>
    %29 = tpu.reciprocal %28 {approx = true} : vector<16x1xf32> -> vector<16x1xf32>
    %30 = vector.broadcast %29 : vector<16x1xf32> to vector<16x128xf32>
    %31 = arith.mulf %26, %30 : vector<16x128xf32>
    %32 = tpu.iota {dimensions = array<i32: 1>} : vector<16x128xi32>
    %33 = vector.broadcast %23 : vector<16x1xf32> to vector<16x128xf32>
    %34 = arith.cmpf oeq, %21, %33 : vector<16x128xf32>
    %c128_i32 = arith.constant 128 : i32
    %35 = vector.broadcast %c128_i32 : i32 to vector<16x128xi32>
    %36 = arith.select %34, %32, %35 : vector<16x128xi1>, vector<16x128xi32>
    %cst_20 = arith.constant dense<2147483647> : vector<16xi32>
    %37 = vector.multi_reduction <minsi>, %36, %cst_20 [1] : vector<16x128xi32> to vector<16xi32>
    %38 = vector.shape_cast %37 : vector<16xi32> to vector<16x1xi32>
    %39 = vector.broadcast %38 : vector<16x1xi32> to vector<16x128xi32>
    %40 = arith.cmpi eq, %32, %39 : vector<16x128xi32>
    %41 = arith.extui %40 : vector<16x128xi1> to vector<16x128xi32>
    %42 = arith.sitofp %41 : vector<16x128xi32> to vector<16x128xf32>
    %43 = arith.subf %42, %31 : vector<16x128xf32>
    %44 = arith.addf %43, %31 : vector<16x128xf32>
    %c0_21 = arith.constant 0 : index
    %c0_22 = arith.constant 0 : index
    %45 = vector.load %arg9[%c0_21, %c0_22] : memref<16x128xf32, #tpu.memory_space<vmem>>, vector<16x128xf32>
    tpu.vector_store %arg9[%c0_21, %c0_22], %44 {strides = array<i32>} : memref<16x128xf32, #tpu.memory_space<vmem>>, vector<16x128xf32>,
    return
  }
  func.func @transform_0(%arg0: i32) -> (i32, i32) {
    %c0_i32 = arith.constant 0 : i32
    %c0_i32_0 = arith.constant 0 : i32
    return %arg0, %c0_i32 : i32, i32
  }
  func.func @transform_1(%arg0: i32) -> (i32, i32) {
    %c0_i32 = arith.constant 0 : i32
    %c0_i32_0 = arith.constant 0 : i32
    return %arg0, %c0_i32 : i32, i32
  }
  func.func @transform_2(%arg0: i32) -> (i32, i32) {
    %c0_i32 = arith.constant 0 : i32
    %c0_i32_0 = arith.constant 0 : i32
    %c0_i32_1 = arith.constant 0 : i32
    return %c0_i32, %c0_i32_0 : i32, i32
  }
  func.func @transform_3(%arg0: i32) -> (i32, i32) {
    %c0_i32 = arith.constant 0 : i32
    %c0_i32_0 = arith.constant 0 : i32
    %c0_i32_1 = arith.constant 0 : i32
    return %c0_i32, %c0_i32_0 : i32, i32
  }
  func.func @transform_4(%arg0: i32) -> (i32, i32) {
    %c0_i32 = arith.constant 0 : i32
    %c0_i32_0 = arith.constant 0 : i32
    %c0_i32_1 = arith.constant 0 : i32
    return %c0_i32, %c0_i32_0 : i32, i32
  }
  func.func @transform_5(%arg0: i32) -> (i32, i32) {
    %c0_i32 = arith.constant 0 : i32
    %c0_i32_0 = arith.constant 0 : i32
    %c0_i32_1 = arith.constant 0 : i32
    return %c0_i32, %c0_i32_0 : i32, i32
  }
  func.func @transform_6(%arg0: i32) -> (i32, i32) {
    %c0_i32 = arith.constant 0 : i32
    %c0_i32_0 = arith.constant 0 : i32
    %c0_i32_1 = arith.constant 0 : i32
    return %c0_i32, %c0_i32_0 : i32, i32
  }
  func.func @transform_7(%arg0: i32) -> (i32, i32) {
    %c0_i32 = arith.constant 0 : i32
    %c0_i32_0 = arith.constant 0 : i32
    %c0_i32_1 = arith.constant 0 : i32
    return %c0_i32, %c0_i32_0 : i32, i32
  }
  func.func @transform_8(%arg0: i32) -> (i32, i32) {
    %c0_i32 = arith.constant 0 : i32
    %c0_i32_0 = arith.constant 0 : i32
    return %arg0, %c0_i32 : i32, i32
  }
}

</mosaic_0001>

<llo_original>
// kernel: tpu_custom_call.1
$region0: #{tpu_custom_call.1}
  #allocation0 [shape = 'u32[]', space=smem, size = 0x4, offset = 0x4, fixed_abs, tag = 'smem constant byte address 0x4 - core index']
  #allocation1 [shape = 'u32[144,128]{1,0:T(1,128)}', space=vmem, size = 0x12000, scoped, tag = 'internal scratch']
  %s0 = inlined_call_operand.vmem [shape: f32[32,16], index: 0, kind: input, shape index: {}]
  %s1 = inlined_call_operand.vmem [shape: f32[32,128], index: 1, kind: input, shape index: {}]
  %s2 = inlined_call_operand.vmem [shape: f32[16,32], index: 2, kind: input, shape index: {}]
  %s3 = inlined_call_operand.vmem [shape: f32[1,32], index: 3, kind: input, shape index: {}]
  %s4 = inlined_call_operand.hbm [shape: f32[32,32], index: 4, kind: input, shape index: {}]
  %s5 = inlined_call_operand.vmem [shape: f32[1,32], index: 5, kind: input, shape index: {}]
  %s6 = inlined_call_operand.hbm [shape: f32[32,128], index: 6, kind: input, shape index: {}]
  %s7 = inlined_call_operand.vmem [shape: f32[1,128], index: 7, kind: input, shape index: {}]
  %s8 = inlined_call_operand.hbm [shape: f32[32,128], index: 8, kind: output, shape index: {}]
  %s9 = sld [smem:[#allocation0]]
  $region73: #{tpu_custom_call.1} parent=0
    _
  %s11 = ssub.s32 1, %s9
  %s12 = scalar_select 0, %s11, %s9
  $region1: #{tpu_custom_call.1} parent=0
    #allocation2 [shape = 'u8[16384]{0}', space=vmem, size = 0x4000, scoped, tag = 'input window, operand 4, single buffered']
    #allocation3 [shape = 's32[2]{0}', space=sflag, size = 0x8, scoped, tag = 'scoped memory for tpu_custom_call.1']
    #allocation4 [shape = 's32[2]{0}', space=sflag, size = 0x8, scoped, tag = 'scoped memory for tpu_custom_call.1']
    #allocation5 [shape = 'u8[16384]{0}', space=vmem, size = 0x4000, scoped, tag = 'input window, operand 6, single buffered']
    #allocation6 [shape = 's32[1]{0}', space=sflag, size = 0x4, scoped, tag = 'scoped memory for tpu_custom_call.1']
    #allocation7 [shape = 'u8[16384]{0}', space=vmem, size = 0x4000, scoped, tag = 'output window, operand 0']
    %13 = vsyncpa [#allocation3], 0
    %14 = vsyncpa [#allocation6], 0
    %15 = vsyncpa [#allocation4], 0
    %s16 = scalar_lea.sflag [#allocation4], 1
    %17 = vsyncpa %s16, 0
    loop: start=0, step=1, limit=4
    $region2: #{tpu_custom_call.1} parent=1 // loop_pre_header
      _
    $region3: #{tpu_custom_call.1} parent=1 // loop_header
      %s19 = sphi 0, %s23
      %p20 = scmp.ge.s32.totalorder %s19, 4
      %s29 = sphi 0, %s31
      %s32 = sphi 0, %s29
      %s33 = sphi 0, %s32
      %s49 = sphi 0, %s33
      %s55 = sphi 0, %s57
      %s58 = sphi 0, %s55
      %s59 = sphi 0, %s58
      %s75 = sphi 0, %s59
      %s79 = sphi 0, %s79
      %s81 = sphi 0, %s79
      %s82 = sphi 0, %s81
      %s96 = sphi 0, %s82
      %s100 = sphi 0, %s100
      %s102 = sphi 0, %s100
      %s103 = sphi 0, %s102
      %s117 = sphi 0, %s103
      %s121 = sphi 0, %s121
      %s123 = sphi 0, %s121
      %s124 = sphi 0, %s123
      %s138 = sphi 0, %s124
      %s142 = sphi 0, %s142
      %s144 = sphi 0, %s142
      %s145 = sphi 0, %s144
      %s159 = sphi 0, %s145
      %s163 = sphi 0, %s163
      %s165 = sphi 0, %s163
      %s166 = sphi 0, %s165
      %s180 = sphi 0, %s166
      %s184 = sphi 0, %s184
      %s186 = sphi 0, %s184
      %s187 = sphi 0, %s186
      %s201 = sphi 0, %s187
      %s207 = sphi 0, %s209
      %s210 = sphi 0, %s207
      %s211 = sphi 0, %s210
      %s227 = sphi 0, %s211
    $region4: #{tpu_custom_call.1} parent=1 // loop_header_branch
      %22 = sbr.rel (%p20) target = $region8
    $region5: #{tpu_custom_call.1} parent=1 // loop_body
      %s24 = ssub.s32 %s19, 1
      %s25 = ssub.s32 %s19, 2
      %s26 = sadd.s32 %s19, 1
      %s27 = ssub.s32 %s19, %s26
      %p28 = scmp.eq.s32.totalorder %s27, 0
      %s30 = sadd.s32 %s29, 1
      %s31 = scalar_select %p28, %s29, %s30
      %p34 = pneg %p28
      %p35 = scmp.eq.s32.totalorder %s19, 1
      %p36 = por %p34, %p35
      %p37 = scmp.ne.s32.totalorder %s29, %s32
      %p38 = scmp.eq.s32.totalorder %s19, 0
      %p39 = por %p37, %p38
      %p40 = scmp.ne.s32.totalorder %s29, %s32
      %p41 = scmp.eq.s32.totalorder %s24, 1
      %p42 = por %p40, %p41
      %p43 = scmp.ne.s32.totalorder %s32, %s33
      %p44 = scmp.eq.s32.totalorder %s24, 0
      %p45 = por %p43, %p44
      %p46 = scmp.ne.s32.totalorder %s32, %s33
      %p47 = scmp.eq.s32.totalorder %s25, 1
      %p48 = por %p46, %p47
      %p50 = scmp.ne.s32.totalorder %s33, %s49
      %p51 = scmp.eq.s32.totalorder %s25, 0
      %p52 = por %p50, %p51
      %s53 = ssub.s32 %s19, %s26
      %p54 = scmp.eq.s32.totalorder %s53, 0
      %s56 = sadd.s32 %s55, 1
      %s57 = scalar_select %p54, %s55, %s56
      %p60 = pneg %p54
      %p61 = scmp.eq.s32.totalorder %s19, 1
      %p62 = por %p60, %p61
      %p63 = scmp.ne.s32.totalorder %s55, %s58
      %p64 = scmp.eq.s32.totalorder %s19, 0
      %p65 = por %p63, %p64
      %p66 = scmp.ne.s32.totalorder %s55, %s58
      %p67 = scmp.eq.s32.totalorder %s24, 1
      %p68 = por %p66, %p67
      %p69 = scmp.ne.s32.totalorder %s58, %s59
      %p70 = scmp.eq.s32.totalorder %s24, 0
      %p71 = por %p69, %p70
      %p72 = scmp.ne.s32.totalorder %s58, %s59
      %p73 = scmp.eq.s32.totalorder %s25, 1
      %p74 = por %p72, %p73
      %p76 = scmp.ne.s32.totalorder %s59, %s75
      %p77 = scmp.eq.s32.totalorder %s25, 0
      %p78 = por %p76, %p77
      %s80 = sadd.s32 %s79, 1
      %p83 = scmp.eq.s32.totalorder %s19, 1
      %p84 = scmp.ne.s32.totalorder %s79, %s81
      %p85 = scmp.eq.s32.totalorder %s19, 0
      %p86 = por %p84, %p85
      %p87 = scmp.ne.s32.totalorder %s79, %s81
      %p88 = scmp.eq.s32.totalorder %s24, 1
      %p89 = por %p87, %p88
      %p90 = scmp.ne.s32.totalorder %s81, %s82
      %p91 = scmp.eq.s32.totalorder %s24, 0
      %p92 = por %p90, %p91
      %p93 = scmp.ne.s32.totalorder %s81, %s82
      %p94 = scmp.eq.s32.totalorder %s25, 1
      %p95 = por %p93, %p94
      %p97 = scmp.ne.s32.totalorder %s82, %s96
      %p98 = scmp.eq.s32.totalorder %s25, 0
      %p99 = por %p97, %p98
      %s101 = sadd.s32 %s100, 1
      %p104 = scmp.eq.s32.totalorder %s19, 1
      %p105 = scmp.ne.s32.totalorder %s100, %s102
      %p106 = scmp.eq.s32.totalorder %s19, 0
      %p107 = por %p105, %p106
      %p108 = scmp.ne.s32.totalorder %s100, %s102
      %p109 = scmp.eq.s32.totalorder %s24, 1
      %p110 = por %p108, %p109
      %p111 = scmp.ne.s32.totalorder %s102, %s103
      %p112 = scmp.eq.s32.totalorder %s24, 0
      %p113 = por %p111, %p112
      %p114 = scmp.ne.s32.totalorder %s102, %s103
      %p115 = scmp.eq.s32.totalorder %s25, 1
      %p116 = por %p114, %p115
      %p118 = scmp.ne.s32.totalorder %s103, %s117
      %p119 = scmp.eq.s32.totalorder %s25, 0
      %p120 = por %p118, %p119
      %s122 = sadd.s32 %s121, 1
      %p125 = scmp.eq.s32.totalorder %s19, 1
      %p126 = scmp.ne.s32.totalorder %s121, %s123
      %p127 = scmp.eq.s32.totalorder %s19, 0
      %p128 = por %p126, %p127
      %p129 = scmp.ne.s32.totalorder %s121, %s123
      %p130 = scmp.eq.s32.totalorder %s24, 1
      %p131 = por %p129, %p130
      %p132 = scmp.ne.s32.totalorder %s123, %s124
      %p133 = scmp.eq.s32.totalorder %s24, 0
      %p134 = por %p132, %p133
      %p135 = scmp.ne.s32.totalorder %s123, %s124
      %p136 = scmp.eq.s32.totalorder %s25, 1
      %p137 = por %p135, %p136
      %p139 = scmp.ne.s32.totalorder %s124, %s138
      %p140 = scmp.eq.s32.totalorder %s25, 0
      %p141 = por %p139, %p140
      %s143 = sadd.s32 %s142, 1
      %p146 = scmp.eq.s32.totalorder %s19, 1
      %p147 = scmp.ne.s32.totalorder %s142, %s144
      %p148 = scmp.eq.s32.totalorder %s19, 0
      %p149 = por %p147, %p148
      %p150 = scmp.ne.s32.totalorder %s142, %s144
      %p151 = scmp.eq.s32.totalorder %s24, 1
      %p152 = por %p150, %p151
      %p153 = scmp.ne.s32.totalorder %s144, %s145
      %p154 = scmp.eq.s32.totalorder %s24, 0
      %p155 = por %p153, %p154
      %p156 = scmp.ne.s32.totalorder %s144, %s145
      %p157 = scmp.eq.s32.totalorder %s25, 1
      %p158 = por %p156, %p157
      %p160 = scmp.ne.s32.totalorder %s145, %s159
      %p161 = scmp.eq.s32.totalorder %s25, 0
      %p162 = por %p160, %p161
      %s164 = sadd.s32 %s163, 1
      %p167 = scmp.eq.s32.totalorder %s19, 1
      %p168 = scmp.ne.s32.totalorder %s163, %s165
      %p169 = scmp.eq.s32.totalorder %s19, 0
      %p170 = por %p168, %p169
      %p171 = scmp.ne.s32.totalorder %s163, %s165
      %p172 = scmp.eq.s32.totalorder %s24, 1
      %p173 = por %p171, %p172
      %p174 = scmp.ne.s32.totalorder %s165, %s166
      %p175 = scmp.eq.s32.totalorder %s24, 0
      %p176 = por %p174, %p175
      %p177 = scmp.ne.s32.totalorder %s165, %s166
      %p178 = scmp.eq.s32.totalorder %s25, 1
      %p179 = por %p177, %p178
      %p181 = scmp.ne.s32.totalorder %s166, %s180
      %p182 = scmp.eq.s32.totalorder %s25, 0
      %p183 = por %p181, %p182
      %s185 = sadd.s32 %s184, 1
      %p188 = scmp.eq.s32.totalorder %s19, 1
      %p189 = scmp.ne.s32.totalorder %s184, %s186
      %p190 = scmp.eq.s32.totalorder %s19, 0
      %p191 = por %p189, %p190
      %p192 = scmp.ne.s32.totalorder %s184, %s186
      %p193 = scmp.eq.s32.totalorder %s24, 1
      %p194 = por %p192, %p193
      %p195 = scmp.ne.s32.totalorder %s186, %s187
      %p196 = scmp.eq.s32.totalorder %s24, 0
      %p197 = por %p195, %p196
      %p198 = scmp.ne.s32.totalorder %s186, %s187
      %p199 = scmp.eq.s32.totalorder %s25, 1
      %p200 = por %p198, %p199
      %p202 = scmp.ne.s32.totalorder %s187, %s201
      %p203 = scmp.eq.s32.totalorder %s25, 0
      %p204 = por %p202, %p203
      %s205 = ssub.s32 %s19, %s26
      %p206 = scmp.eq.s32.totalorder %s205, 0
      %s208 = sadd.s32 %s207, 1
      %s209 = scalar_select %p206, %s207, %s208
      %p212 = pneg %p206
      %p213 = scmp.eq.s32.totalorder %s19, 1
      %p214 = por %p212, %p213
      %p215 = scmp.ne.s32.totalorder %s207, %s210
      %p216 = scmp.eq.s32.totalorder %s19, 0
      %p217 = por %p215, %p216
      %p218 = scmp.ne.s32.totalorder %s207, %s210
      %p219 = scmp.eq.s32.totalorder %s24, 1
      %p220 = por %p218, %p219
      %p221 = scmp.ne.s32.totalorder %s210, %s211
      %p222 = scmp.eq.s32.totalorder %s24, 0
      %p223 = por %p221, %p222
      %p224 = scmp.ne.s32.totalorder %s210, %s211
      %p225 = scmp.eq.s32.totalorder %s25, 1
      %p226 = por %p224, %p225
      %p228 = scmp.ne.s32.totalorder %s211, %s227
      %p229 = scmp.eq.s32.totalorder %s25, 0
      %p230 = por %p228, %p229
      %p231 = scmp.le.s32.totalorder 1, %s19
      %p232 = scmp.lt.s32.totalorder %s19, 3
      %p233 = pnand %p231, %p232
      %p234 = pneg %p233
      // Predicated region
      $region9: #{tpu_custom_call.1} parent=5 // pred_check
        _
      $region10: #{tpu_custom_call.1} parent=5 // pred_check_branch
        %236 = sbr.rel (%p233) target = $region12
      $region11: #{tpu_custom_call.1} parent=5 // pred_region
        %s237 = ssub.s32 %s19, 1
        // Predicated region
        $region13: #{tpu_custom_call.1} parent=11 // pred_check
          %p238 = pneg %p92
        $region14: #{tpu_custom_call.1} parent=11 // pred_check_branch
          %240 = sbr.rel (%p238) target = $region16
        $region15: #{tpu_custom_call.1} parent=11 // pred_region
          _
        $region16: #{tpu_custom_call.1} parent=11 // pred_fallthru
          _
        // Predicated region
        $region17: #{tpu_custom_call.1} parent=11 // pred_check
          %p241 = pneg %p113
        $region18: #{tpu_custom_call.1} parent=11 // pred_check_branch
          %243 = sbr.rel (%p241) target = $region20
        $region19: #{tpu_custom_call.1} parent=11 // pred_region
          _
        $region20: #{tpu_custom_call.1} parent=11 // pred_fallthru
          _
        // Predicated region
        $region21: #{tpu_custom_call.1} parent=11 // pred_check
          %p244 = pneg %p134
        $region22: #{tpu_custom_call.1} parent=11 // pred_check_branch
          %246 = sbr.rel (%p244) target = $region24
        $region23: #{tpu_custom_call.1} parent=11 // pred_region
          %s248 = ssub.s32 512, 512
          %249 = vsyncadd [#allocation3], %s248
          %s250 = sshll.u32 [#allocation2], 4
          %s251 = int_to_ptr.vmem [resolvable:$true] %s250
          %256 = dma.hbm_to_vmem [thread:$0]  %s4, 512, %s251, [#allocation3], 128, 128, 8
        $region24: #{tpu_custom_call.1} parent=11 // pred_fallthru
          _
        // Predicated region
        $region25: #{tpu_custom_call.1} parent=11 // pred_check
          %p257 = pneg %p155
        $region26: #{tpu_custom_call.1} parent=11 // pred_check_branch
          %259 = sbr.rel (%p257) target = $region28
        $region27: #{tpu_custom_call.1} parent=11 // pred_region
          _
        $region28: #{tpu_custom_call.1} parent=11 // pred_fallthru
          _
        // Predicated region
        $region29: #{tpu_custom_call.1} parent=11 // pred_check
          %p260 = pneg %p176
        $region30: #{tpu_custom_call.1} parent=11 // pred_check_branch
          %262 = sbr.rel (%p260) target = $region32
        $region31: #{tpu_custom_call.1} parent=11 // pred_region
          %s264 = ssub.s32 512, 512
          %265 = vsyncadd [#allocation6], %s264
          %s266 = sshll.u32 [#allocation5], 4
          %s267 = int_to_ptr.vmem [resolvable:$true] %s266
          %272 = dma.hbm_to_vmem [thread:$0]  %s6, 512, %s267, [#allocation6], 128, 128, 8
        $region32: #{tpu_custom_call.1} parent=11 // pred_fallthru
          _
        // Predicated region
        $region33: #{tpu_custom_call.1} parent=11 // pred_check
          %p273 = pneg %p197
        $region34: #{tpu_custom_call.1} parent=11 // pred_check_branch
          %275 = sbr.rel (%p273) target = $region36
        $region35: #{tpu_custom_call.1} parent=11 // pred_region
          _
        $region36: #{tpu_custom_call.1} parent=11 // pred_fallthru
          _
      $region12: #{tpu_custom_call.1} parent=5 // pred_fallthru
        _
      %p276 = scmp.lt.s32.totalorder %s19, 2
      // Predicated region
      $region37: #{tpu_custom_call.1} parent=5 // pred_check
        %p277 = pneg %p276
      $region38: #{tpu_custom_call.1} parent=5 // pred_check_branch
        %279 = sbr.rel (%p277) target = $region40
      $region39: #{tpu_custom_call.1} parent=5 // pred_region
        // Predicated region
        $region41: #{tpu_custom_call.1} parent=39 // pred_check
          %p280 = pneg %p39
        $region42: #{tpu_custom_call.1} parent=39 // pred_check_branch
          %282 = sbr.rel (%p280) target = $region44
        $region43: #{tpu_custom_call.1} parent=39 // pred_region
          %s283 = smul.u32 2, %s19
          %p284 = scmp.lt.s32.totalorder %s283, 3
          %s285 = scalar_select %p284, %s283, 3
          %s286 = smul.addr %s285, 8
          %s287 = scalar_lea.vmem %s0, %s286
          %s288 = smul.u32 2, %s19
        $region44: #{tpu_custom_call.1} parent=39 // pred_fallthru
          _
        // Predicated region
        $region45: #{tpu_custom_call.1} parent=39 // pred_check
          %p289 = pneg %p65
        $region46: #{tpu_custom_call.1} parent=39 // pred_check_branch
          %291 = sbr.rel (%p289) target = $region48
        $region47: #{tpu_custom_call.1} parent=39 // pred_region
          %s292 = smul.u32 2, %s19
          %p293 = scmp.lt.s32.totalorder %s292, 3
          %s294 = scalar_select %p293, %s292, 3
          %s295 = smul.addr %s294, 8
          %s296 = scalar_lea.vmem %s1, %s295
          %s297 = smul.u32 2, %s19
        $region48: #{tpu_custom_call.1} parent=39 // pred_fallthru
          _
      $region40: #{tpu_custom_call.1} parent=5 // pred_fallthru
        _
      %p298 = scmp.le.s32.totalorder 1, %s19
      %p299 = scmp.lt.s32.totalorder %s19, 3
      %p300 = pnand %p298, %p299
      %p301 = pneg %p300
      // Predicated region
      $region49: #{tpu_custom_call.1} parent=5 // pred_check
        _
      $region50: #{tpu_custom_call.1} parent=5 // pred_check_branch
        %303 = sbr.rel (%p300) target = $region52
      $region51: #{tpu_custom_call.1} parent=5 // pred_region
        %s304 = ssub.s32 %s19, 1
        // Predicated region
        $region53: #{tpu_custom_call.1} parent=51 // pred_check
          %p305 = pneg %p134
        $region54: #{tpu_custom_call.1} parent=51 // pred_check_branch
          %307 = sbr.rel (%p305) target = $region56
        $region55: #{tpu_custom_call.1} parent=51 // pred_region
          %308 = dma.done [#allocation3], 512
        $region56: #{tpu_custom_call.1} parent=51 // pred_fallthru
          _
        // Predicated region
        $region57: #{tpu_custom_call.1} parent=51 // pred_check
          %p309 = pneg %p176
        $region58: #{tpu_custom_call.1} parent=51 // pred_check_branch
          %311 = sbr.rel (%p309) target = $region60
        $region59: #{tpu_custom_call.1} parent=51 // pred_region
          %312 = dma.done [#allocation6], 512
        $region60: #{tpu_custom_call.1} parent=51 // pred_fallthru
          _
        %s313 = smul.u32 2, %s24
        %p314 = scmp.lt.s32.totalorder %s313, 3
        %s315 = scalar_select %p314, %s313, 3
        %s316 = smul.addr %s315, 8
        %s317 = scalar_lea.vmem %s0, %s316
        %p318 = pneg %p45
        %p319 = pneg %p42
        %s320 = smul.u32 2, %s24
        %p321 = scmp.lt.s32.totalorder %s320, 3
        %s322 = scalar_select %p321, %s320, 3
        %s323 = smul.addr %s322, 8
        %s324 = scalar_lea.vmem %s1, %s323
        %p325 = pneg %p71
        %p326 = pneg %p68
        %p327 = pneg %p92
        %p328 = pneg %p89
        %p329 = pneg %p113
        %p330 = pneg %p110
        %p331 = pneg %p134
        %p332 = pneg %p131
        %p333 = pneg %p155
        %p334 = pneg %p152
        %p335 = pneg %p176
        %p336 = pneg %p173
        %p337 = pneg %p197
        %p338 = pneg %p194
        %p339 = pneg %p223
        %p340 = pneg %p220
        %s341 = sand.u32 %s210, 1
        %s342 = scalar_lea.sflag [#allocation4], %s341
        %s343 = sand.u32 %s210, 1
        %s344 = smul.addr %s343, 16
        %s345 = scalar_lea.vmem [#allocation7], %s344
        %s346 = smul.u32 2, %s24
        %p347 = scmp.lt.s32.totalorder %s346, 3
        %s348 = scalar_select %p347, %s346, 3
        %s349 = smul.addr %s348, 8
        %s350 = scalar_lea.vmem %s0, %s349
        %s351 = smul.u32 2, %s24
        %s352 = smul.u32 2, %s24
        %p353 = scmp.lt.s32.totalorder %s352, 3
        %s354 = scalar_select %p353, %s352, 3
        %s355 = smul.addr %s354, 8
        %s356 = scalar_lea.vmem %s1, %s355
        %s357 = smul.u32 2, %s24
        %s358 = smul.u32 2, %s24
        %v359 = vld [vmem:[%s350] sm:$0xff]
        %v360 = vld [vmem:[%s350 + $0x8] sm:$0xff]
        %v361 = vld [vmem:[%s2] sm:$0xff]
        %v362 = vld [vmem:[%s2 + $0x8] sm:$0xff]
        %v363 = vld [vmem:[%s3] sm:$0x1]
        %v365 = vlaneseq
        %v366 = vshrl.u32 %v365, 7
        %v367 = vsub.s32 0, %v366
        %v368 = vrot.slane %v363, %v367
        %vm370 = vcmask 130048
        %v372 = vsel %vm370, %v359, 0
        %v375 = vsel %vm370, %v360, 0
        %377 = vmatprep.subr.mxu0 0.0
        %378 = vmatpush1.msra.mxu0 0.0
        %379 = vmatprep.subr.mxu0 0.0
        %380 = vmatpush1.msra.mxu0 0.0
        %381 = vmatprep.subr.mxu0 0.0
        %382 = vmatpush1.msra.mxu0 0.0
        %383 = vmatprep.subr.mxu0 0.0
        %384 = vmatpush1.msra.mxu0 0.0
        %385 = vmatprep.subr.mxu0 0.0
        %386 = vmatpush1.msra.mxu0 0.0
        %387 = vmatprep.subr.mxu0 0.0
        %388 = vmatpush1.msra.mxu0 0.0
        %389 = vmatprep.subr.mxu0 0.0
        %390 = vmatpush1.msra.mxu0 0.0
        %391 = vmatprep.subr.mxu0 0.0
        %392 = vmatpush1.msra.mxu0 0.0
        %393 = vmatprep.subr.mxu0 0.0
        %394 = vmatpush1.msra.mxu0 0.0
        %395 = vmatprep.subr.mxu0 0.0
        %396 = vmatpush1.msra.mxu0 0.0
        %397 = vmatprep.subr.mxu0 0.0
        %398 = vmatpush1.msra.mxu0 0.0
        %399 = vmatprep.subr.mxu0 0.0
        %400 = vmatpush1.msra.mxu0 0.0
        %401 = vmatprep.subr.mxu0 0.0
        %402 = vmatpush1.msra.mxu0 0.0
        %403 = vmatprep.subr.mxu0 0.0
        %404 = vmatpush1.msra.mxu0 0.0
        %405 = vmatprep.subr.mxu0 0.0
        %406 = vmatpush1.msra.mxu0 %v362
        %407 = vmatprep.subr.mxu0 0.0
        %408 = vmatpush1.msra.mxu0 %v361
        %409 = vmatprep.subr.mxu0 0.0
        %410 = vmatpush2.msra.mxu0 0.0
        %411 = vmatprep.subr.mxu0 0.0
        %412 = vmatpush2.msra.mxu0 0.0
        %413 = vmatprep.subr.mxu0 0.0
        %414 = vmatpush2.msra.mxu0 0.0
        %415 = vmatprep.subr.mxu0 0.0
        %416 = vmatpush2.msra.mxu0 0.0
        %417 = vmatprep.subr.mxu0 0.0
        %418 = vmatpush2.msra.mxu0 0.0
        %419 = vmatprep.subr.mxu0 0.0
        %420 = vmatpush2.msra.mxu0 0.0
        %421 = vmatprep.subr.mxu0 0.0
        %422 = vmatpush2.msra.mxu0 0.0
        %423 = vmatprep.subr.mxu0 0.0
        %424 = vmatpush2.msra.mxu0 0.0
        %425 = vmatprep.subr.mxu0 0.0
        %426 = vmatpush2.msra.mxu0 0.0
        %427 = vmatprep.subr.mxu0 0.0
        %428 = vmatpush2.msra.mxu0 0.0
        %429 = vmatprep.subr.mxu0 0.0
        %430 = vmatpush2.msra.mxu0 0.0
        %431 = vmatprep.subr.mxu0 0.0
        %432 = vmatpush2.msra.mxu0 0.0
        %433 = vmatprep.subr.mxu0 0.0
        %434 = vmatpush2.msra.mxu0 0.0
        %435 = vmatprep.subr.mxu0 0.0
        %436 = vmatpush2.msra.mxu0 0.0
        %437 = vmatprep.subr.mxu0 0.0
        %438 = vmatpush2.msra.mxu0 0.0
        %439 = vmatprep.subr.mxu0 0.0
        %440 = vmatpush2.msra.mxu0 0.0
        %441 = vmatprep.mubr.f32.mxu0 0.0
        %442 = vmatmul.mubr.f32.gmra.mxu0 %v372
        %v443 = vpop.f32.mrf.mxu0
        %v444 = vadd.f32 %v368, %v443
        %v445 = vpop.f32.mrf.mxu0
        %446 = vmatprep.mubr.f32.mxu0 0.0
        %447 = vmatmul.mubr.f32.gmra.mxu0 %v375
        %v448 = vpop.f32.mrf.mxu0
        %v449 = vadd.f32 %v368, %v448
        %v450 = vpop.f32.mrf.mxu0
        %451 = vdwg.mxu0
        %v452 = vld [vmem:[#allocation2] sm:$0xff]
        %v453 = vld [vmem:[#allocation2 + $0x8] sm:$0xff]
        %v454 = vld [vmem:[#allocation2 + $0x10] sm:$0xff]
        %v455 = vld [vmem:[#allocation2 + $0x18] sm:$0xff]
        %v456 = vld [vmem:[%s5] sm:$0x1]
        %v458 = vlaneseq
        %v459 = vshrl.u32 %v458, 7
        %v460 = vsub.s32 0, %v459
        %v461 = vrot.slane %v456, %v460
        %vm463 = vcmask 261120
        %v465 = vsel %vm463, %v444, 0
        %v468 = vsel %vm463, %v449, 0
        %470 = vmatprep.subr.mxu0 0.0
        %471 = vmatpush1.msra.mxu0 0.0
        %472 = vmatprep.subr.mxu0 0.0
        %473 = vmatpush1.msra.mxu0 0.0
        %474 = vmatprep.subr.mxu0 0.0
        %475 = vmatpush1.msra.mxu0 0.0
        %476 = vmatprep.subr.mxu0 0.0
        %477 = vmatpush1.msra.mxu0 0.0
        %478 = vmatprep.subr.mxu0 0.0
        %479 = vmatpush1.msra.mxu0 0.0
        %480 = vmatprep.subr.mxu0 0.0
        %481 = vmatpush1.msra.mxu0 0.0
        %482 = vmatprep.subr.mxu0 0.0
        %483 = vmatpush1.msra.mxu0 0.0
        %484 = vmatprep.subr.mxu0 0.0
        %485 = vmatpush1.msra.mxu0 0.0
        %486 = vmatprep.subr.mxu0 0.0
        %487 = vmatpush1.msra.mxu0 0.0
        %488 = vmatprep.subr.mxu0 0.0
        %489 = vmatpush1.msra.mxu0 0.0
        %490 = vmatprep.subr.mxu0 0.0
        %491 = vmatpush1.msra.mxu0 0.0
        %492 = vmatprep.subr.mxu0 0.0
        %493 = vmatpush1.msra.mxu0 0.0
        %494 = vmatprep.subr.mxu0 0.0
        %495 = vmatpush1.msra.mxu0 %v455
        %496 = vmatprep.subr.mxu0 0.0
        %497 = vmatpush1.msra.mxu0 %v454
        %498 = vmatprep.subr.mxu0 0.0
        %499 = vmatpush1.msra.mxu0 %v453
        %500 = vmatprep.subr.mxu0 0.0
        %501 = vmatpush1.msra.mxu0 %v452
        %502 = vmatprep.subr.mxu0 0.0
        %503 = vmatpush2.msra.mxu0 0.0
        %504 = vmatprep.subr.mxu0 0.0
        %505 = vmatpush2.msra.mxu0 0.0
        %506 = vmatprep.subr.mxu0 0.0
        %507 = vmatpush2.msra.mxu0 0.0
        %508 = vmatprep.subr.mxu0 0.0
        %509 = vmatpush2.msra.mxu0 0.0
        %510 = vmatprep.subr.mxu0 0.0
        %511 = vmatpush2.msra.mxu0 0.0
        %512 = vmatprep.subr.mxu0 0.0
        %513 = vmatpush2.msra.mxu0 0.0
        %514 = vmatprep.subr.mxu0 0.0
        %515 = vmatpush2.msra.mxu0 0.0
        %516 = vmatprep.subr.mxu0 0.0
        %517 = vmatpush2.msra.mxu0 0.0
        %518 = vmatprep.subr.mxu0 0.0
        %519 = vmatpush2.msra.mxu0 0.0
        %520 = vmatprep.subr.mxu0 0.0
        %521 = vmatpush2.msra.mxu0 0.0
        %522 = vmatprep.subr.mxu0 0.0
        %523 = vmatpush2.msra.mxu0 0.0
        %524 = vmatprep.subr.mxu0 0.0
        %525 = vmatpush2.msra.mxu0 0.0
        %526 = vmatprep.subr.mxu0 0.0
        %527 = vmatpush2.msra.mxu0 0.0
        %528 = vmatprep.subr.mxu0 0.0
        %529 = vmatpush2.msra.mxu0 0.0
        %530 = vmatprep.subr.mxu0 0.0
        %531 = vmatpush2.msra.mxu0 0.0
        %532 = vmatprep.subr.mxu0 0.0
        %533 = vmatpush2.msra.mxu0 0.0
        %534 = vmatprep.mubr.f32.mxu0 0.0
        %535 = vmatmul.mubr.f32.gmra.mxu0 %v465
        %v536 = vpop.f32.mrf.mxu0
        %v537 = vadd.f32 %v461, %v536
        %v538 = vpop.f32.mrf.mxu0
        %539 = vmatprep.mubr.f32.mxu0 0.0
        %540 = vmatmul.mubr.f32.gmra.mxu0 %v468
        %v541 = vpop.f32.mrf.mxu0
        %v542 = vadd.f32 %v461, %v541
        %v543 = vpop.f32.mrf.mxu0
        %544 = vdwg.mxu0
        %v545 = vtanh.pop %v537
        %v546 = vtanh.pop %v542
        %v547 = vld [vmem:[#allocation5] sm:$0xff]
        %v548 = vld [vmem:[#allocation5 + $0x8] sm:$0xff]
        %v549 = vld [vmem:[#allocation5 + $0x10] sm:$0xff]
        %v550 = vld [vmem:[#allocation5 + $0x18] sm:$0xff]
        %v551 = vld [vmem:[%s7] sm:$0x1]
        %v553 = vlaneseq
        %v554 = vshrl.u32 %v553, 7
        %v555 = vsub.s32 0, %v554
        %v556 = vrot.slane %v551, %v555
        %v559 = vsel %vm463, %v545, 0
        %v562 = vsel %vm463, %v546, 0
        %564 = vmatprep.subr.mxu0 0.0
        %565 = vmatpush1.msra.mxu0 0.0
        %566 = vmatprep.subr.mxu0 0.0
        %567 = vmatpush1.msra.mxu0 0.0
        %568 = vmatprep.subr.mxu0 0.0
        %569 = vmatpush1.msra.mxu0 0.0
        %570 = vmatprep.subr.mxu0 0.0
        %571 = vmatpush1.msra.mxu0 0.0
        %572 = vmatprep.subr.mxu0 0.0
        %573 = vmatpush1.msra.mxu0 0.0
        %574 = vmatprep.subr.mxu0 0.0
        %575 = vmatpush1.msra.mxu0 0.0
        %576 = vmatprep.subr.mxu0 0.0
        %577 = vmatpush1.msra.mxu0 0.0
        %578 = vmatprep.subr.mxu0 0.0
        %579 = vmatpush1.msra.mxu0 0.0
        %580 = vmatprep.subr.mxu0 0.0
        %581 = vmatpush1.msra.mxu0 0.0
        %582 = vmatprep.subr.mxu0 0.0
        %583 = vmatpush1.msra.mxu0 0.0
        %584 = vmatprep.subr.mxu0 0.0
        %585 = vmatpush1.msra.mxu0 0.0
        %586 = vmatprep.subr.mxu0 0.0
        %587 = vmatpush1.msra.mxu0 0.0
        %588 = vmatprep.subr.mxu0 0.0
        %589 = vmatpush1.msra.mxu0 %v550
        %590 = vmatprep.subr.mxu0 0.0
        %591 = vmatpush1.msra.mxu0 %v549
        %592 = vmatprep.subr.mxu0 0.0
        %593 = vmatpush1.msra.mxu0 %v548
        %594 = vmatprep.subr.mxu0 0.0
        %595 = vmatpush1.msra.mxu0 %v547
        %596 = vmatprep.subr.mxu0 0.0
        %597 = vmatpush2.msra.mxu0 0.0
        %598 = vmatprep.subr.mxu0 0.0
        %599 = vmatpush2.msra.mxu0 0.0
        %600 = vmatprep.subr.mxu0 0.0
        %601 = vmatpush2.msra.mxu0 0.0
        %602 = vmatprep.subr.mxu0 0.0
        %603 = vmatpush2.msra.mxu0 0.0
        %604 = vmatprep.subr.mxu0 0.0
        %605 = vmatpush2.msra.mxu0 0.0
        %606 = vmatprep.subr.mxu0 0.0
        %607 = vmatpush2.msra.mxu0 0.0
        %608 = vmatprep.subr.mxu0 0.0
        %609 = vmatpush2.msra.mxu0 0.0
        %610 = vmatprep.subr.mxu0 0.0
        %611 = vmatpush2.msra.mxu0 0.0
        %612 = vmatprep.subr.mxu0 0.0
        %613 = vmatpush2.msra.mxu0 0.0
        %614 = vmatprep.subr.mxu0 0.0
        %615 = vmatpush2.msra.mxu0 0.0
        %616 = vmatprep.subr.mxu0 0.0
        %617 = vmatpush2.msra.mxu0 0.0
        %618 = vmatprep.subr.mxu0 0.0
        %619 = vmatpush2.msra.mxu0 0.0
        %620 = vmatprep.subr.mxu0 0.0
        %621 = vmatpush2.msra.mxu0 0.0
        %622 = vmatprep.subr.mxu0 0.0
        %623 = vmatpush2.msra.mxu0 0.0
        %624 = vmatprep.subr.mxu0 0.0
        %625 = vmatpush2.msra.mxu0 0.0
        %626 = vmatprep.subr.mxu0 0.0
        %627 = vmatpush2.msra.mxu0 0.0
        %628 = vmatprep.mubr.f32.mxu0 0.0
        %629 = vmatmul.mubr.f32.gmra.mxu0 %v559
        %v630 = vpop.f32.mrf.mxu0
        %v631 = vadd.f32 %v556, %v630
        %v632 = vpop.f32.mrf.mxu0
        %633 = vmatprep.mubr.f32.mxu0 0.0
        %634 = vmatmul.mubr.f32.gmra.mxu0 %v562
        %v635 = vpop.f32.mrf.mxu0
        %v636 = vadd.f32 %v556, %v635
        %v637 = vpop.f32.mrf.mxu0
        %638 = vdwg.mxu0
        %v639 = vld [vmem:[%s356] sm:$0xff]
        %v640 = vld [vmem:[%s356 + $0x8] sm:$0xff]
        %v641 = vlog2.pop %v639
        %v642 = vmul.f32 %v641, 0.6931472
        %v643 = vlog2.pop %v640
        %v644 = vmul.f32 %v643, 0.6931472
        %v645 = vmax.f32 %v642, -3.4028235e+38
        %v646 = vmax.f32 %v644, -3.4028235e+38
        %v647 = vadd.f32 %v631, %v645
        %v648 = vadd.f32 %v636, %v646
        %649 = vmax.xlane.f32.xlu0 %v647
        %v650 = vpop.xlane.xlu0 %649
        %651 = vmax.xlane.f32.xlu0 %v648
        %v652 = vpop.xlane.xlu0 %651
        %v653 = vsub.f32 %v647, %v650
        %v654 = vsub.f32 %v648, %v652
        %v655 = vmul.f32 %v653, 1.442695
        %v656 = vpow.pop %v655
        %v657 = vmul.f32 %v654, 1.442695
        %v658 = vpow.pop %v657
        %659 = vadd.xlane.f32.xlu0 %v656
        %v660 = vpop.xlane.xlu0 %659
        %661 = vadd.xlane.f32.xlu0 %v658
        %v662 = vpop.xlane.xlu0 %661
        %v663 = vrcp.pop %v660
        %v664 = vrcp.pop %v662
        %v665 = vmul.f32 %v656, %v663
        %v666 = vmul.f32 %v658, %v664
        %v667 = vlaneseq
        %v668 = vand.u32 %v667, 127
        %vm669 = vcmp.eq.f32.partialorder %v647, %v650
        %vm670 = vcmp.eq.f32.partialorder %v648, %v652
        %v671 = vsel %vm669, %v668, 128
        %v672 = vsel %vm670, %v668, 128
        %v673 = vand.u32 %v671, 65535
        %v674 = vshra.s32 %v671, 16
        %v675 = vcvt.s32.f32 %v673
        %v676 = vcvt.s32.f32 %v674
        %677 = vmin.xlane.f32.xlu0 %v676
        %v678 = vpop.xlane.xlu0 %677
        %vm679 = vcmp.eq.f32.partialorder %v676, %v678
        %v680 = vsel %vm679, %v675, inf
        %681 = vmin.xlane.f32.xlu0 %v680
        %v682 = vpop.xlane.xlu0 %681
        %v683 = vcvt.f32.s32 %v682
        %v684 = vcvt.f32.s32 %v678
        %v685 = vshll.u32 %v684, 16
        %v686 = vadd.s32 %v685, %v683
        %v687 = vand.u32 %v672, 65535
        %v688 = vshra.s32 %v672, 16
        %v689 = vcvt.s32.f32 %v687
        %v690 = vcvt.s32.f32 %v688
        %691 = vmin.xlane.f32.xlu0 %v690
        %v692 = vpop.xlane.xlu0 %691
        %vm693 = vcmp.eq.f32.partialorder %v690, %v692
        %v694 = vsel %vm693, %v689, inf
        %695 = vmin.xlane.f32.xlu0 %v694
        %v696 = vpop.xlane.xlu0 %695
        %v697 = vcvt.f32.s32 %v696
        %v698 = vcvt.f32.s32 %v692
        %v699 = vshll.u32 %v698, 16
        %v700 = vadd.s32 %v699, %v697
        %vm701 = vcmp.eq.s32.totalorder %v668, %v686
        %vm702 = vcmp.eq.s32.totalorder %v668, %v700
        %v703 = vsel %vm701, 1, 0
        %v704 = vsel %vm702, 1, 0
        %v705 = vcvt.s32.f32 %v703
        %v706 = vcvt.s32.f32 %v704
        %v707 = vsub.f32 %v705, %v665
        %v708 = vsub.f32 %v706, %v666
        %v709 = vadd.f32 %v707, %v665
        %v710 = vadd.f32 %v708, %v666
        %711 = vst [vmem:[%s345] sm:$0xff] %v709
        %712 = vst [vmem:[%s345 + $0x8] sm:$0xff] %v710
        %s713 = sand.u32 %s210, 1
        %s714 = scalar_lea.sflag [#allocation4], %s713
        %s715 = sand.u32 %s210, 1
        %s716 = smul.addr %s715, 16
        %s717 = scalar_lea.vmem [#allocation7], %s716
        // Predicated region
        $region61: #{tpu_custom_call.1} parent=51 // pred_check
          %p718 = pneg %p220
        $region62: #{tpu_custom_call.1} parent=51 // pred_check_branch
          %720 = sbr.rel (%p718) target = $region64
        $region63: #{tpu_custom_call.1} parent=51 // pred_region
          %s721 = smul.u32 2, %s24
          %s723 = ssub.s32 256, 256
          %724 = vsyncadd %s714, %s723
          %s725 = smul.addr %s721, 128
          %s726 = scalar_lea.hbm %s8, %s725
          %s727 = sshll.u32 %s717, 4
          %s728 = int_to_ptr.vmem [resolvable:$true] %s727
          %733 = dma.vmem_to_hbm [thread:$0]  %s728, 256, %s726, %s714, 128, 128, 8
        $region64: #{tpu_custom_call.1} parent=51 // pred_fallthru
          _
      $region52: #{tpu_custom_call.1} parent=5 // pred_fallthru
        _
      %p734 = scmp.le.s32.totalorder 2, %s19
      // Predicated region
      $region65: #{tpu_custom_call.1} parent=5 // pred_check
        %p735 = pneg %p734
      $region66: #{tpu_custom_call.1} parent=5 // pred_check_branch
        %737 = sbr.rel (%p735) target = $region68
      $region67: #{tpu_custom_call.1} parent=5 // pred_region
        %s738 = ssub.s32 %s19, 2
        // Predicated region
        $region69: #{tpu_custom_call.1} parent=67 // pred_check
          %p739 = pneg %p226
        $region70: #{tpu_custom_call.1} parent=67 // pred_check_branch
          %741 = sbr.rel (%p739) target = $region72
        $region71: #{tpu_custom_call.1} parent=67 // pred_region
          %s742 = sand.u32 %s211, 1
          %s743 = scalar_lea.sflag [#allocation4], %s742
          %s744 = sand.u32 %s211, 1
          %s745 = smul.addr %s744, 16
          %s746 = scalar_lea.vmem [#allocation7], %s745
          %747 = dma.done %s743, 256
        $region72: #{tpu_custom_call.1} parent=67 // pred_fallthru
          _
      $region68: #{tpu_custom_call.1} parent=5 // pred_fallthru
        _
    $region6: #{tpu_custom_call.1} parent=1 // loop_footer
      %s23 = sadd.s32 1, %s19
    $region7: #{tpu_custom_call.1} parent=1 // loop_footer_branch
      %18 = sbr.rel target = $region3
    $region8: #{tpu_custom_call.1} parent=1 // loop_exit
      _
    %748 = vsyncpa [#allocation3], 1
    %s749 = scalar_lea.sflag [#allocation3], 1
    %750 = vsyncpa %s749, 1
    %751 = vsyncpa [#allocation6], 1
    %752 = vsyncpa [#allocation4], 1
    %s753 = scalar_lea.sflag [#allocation4], 1
    %754 = vsyncpa %s753, 1

</llo_original>
